<compile_context>
chip_gen: v7x
topology: tpu7x:2x2x1
jax: 0.10.0
libtpu: 0.0.40
codegen_flags: <defaults>
</compile_context>

<pallas_src>
import functools

import jax
import jax.numpy as jnp
from jax.experimental import pallas as pl
from jax.experimental.pallas import tpu as pltpu


def _basic_block_kernel(xp_ref, m1_ref, s1_ref, b1_ref, m2_ref, s2_ref, b2_ref,
                        out_ref, pad2_ref, *, nb):
    # xp_ref  : (1, P, L) f32   packed, zero-separated, row-folded input block
    #                            (P = nb*(S+1)+1; image i row s at 1+i*(S+1)+s)
    # m1_ref  : (3, L, L) bf16  banded conv1 matrices (super-row offsets -1,0,+1)
    # s1,b1   : (1, L)    f32   fused BN1 scale / bias (lane-tiled)
    # m2_ref  : (3, L, L) bf16  banded conv2 matrices
    # s2,b2   : (1, L)    f32   fused BN2 scale / bias
    # out_ref : (1, nb*S, L) f32
    # pad2_ref: (P, L)    f32   persistent VMEM scratch: re-padded intermediate
    P = xp_ref.shape[1]
    L = xp_ref.shape[2]
    S = (P - 1) // nb - 1
    M = P - 2                      # conv output rows computed per grid step

    # Cast the activations to bf16 once (MXU LHS); the residual path reads the
    # original f32 ref so the skip connection stays exact.
    xb = xp_ref[0].astype(jnp.bfloat16)

    # ---- conv1: three row-shifted, lane-dense, TALL matmuls (bf16 -> f32).
    # Kept as an acc+= chain: with tall M the MRF pops amortize on v5e/v6e and
    # the v7x MRB accumulates in place anyway.
    acc = jnp.dot(xb[0:M, :], m1_ref[0], preferred_element_type=jnp.float32)
    acc += jnp.dot(xb[1:M + 1, :], m1_ref[1], preferred_element_type=jnp.float32)
    acc += jnp.dot(xb[2:M + 2, :], m1_ref[2], preferred_element_type=jnp.float32)

    # ---- bn1 + relu; zero the inter-image separator rows (their conv output
    # is cross-image garbage and they must act as zero padding for conv2) ----
    y1 = jnp.maximum(acc * s1_ref[...] + b1_ref[...], 0.0)
    prow = jax.lax.broadcasted_iota(jnp.int32, (M, 1), 0) + 1   # padded row id
    y1 = jnp.where(prow % (S + 1) == 0, 0.0, y1)

    # ---- re-pad the intermediate in persistent VMEM scratch.  Only the first
    # and last rows are not covered by the block store; zero them every step so
    # megacore-sharded batch steps stay correct with persistent scratch. ----
    pad2_ref[0:1, :] = jnp.zeros((1, L), jnp.float32)
    pad2_ref[P - 1:P, :] = jnp.zeros((1, L), jnp.float32)
    pad2_ref[1:P - 1, :] = y1

    # ---- conv2: cast the whole intermediate to bf16 once, then three taps ----
    pb = pad2_ref[...].astype(jnp.bfloat16)
    acc2 = jnp.dot(pb[0:M, :], m2_ref[0], preferred_element_type=jnp.float32)
    acc2 += jnp.dot(pb[1:M + 1, :], m2_ref[1], preferred_element_type=jnp.float32)
    acc2 += jnp.dot(pb[2:M + 2, :], m2_ref[2], preferred_element_type=jnp.float32)

    # ---- bn2 + residual add (exact f32) + relu; keep only the valid rows ----
    for i in range(nb):
        r = i * (S + 1)
        y2 = acc2[r:r + S, :] * s2_ref[...] + b2_ref[...]
        out_ref[0, i * S:(i + 1) * S, :] = jnp.maximum(
            y2 + xp_ref[0, r + 1:r + 1 + S, :], 0.0)


def _band_matrices(w_hwio, Wd, R):
    """Fold a (3,3,Cin,Cout) conv kernel into 3 block-banded (L,L) matrices.

    M[d][ri*Wd*Cin + wi*Cin + ci, ro*Wd*Cout + wo*Cout + co] = w[dy, dx, ci, co]
    with dy = (d-1)*R + ri - ro + 1 and dx = wi - wo + 1, whenever dy,dx in [0,2].
    The W boundary (padding=1) falls out of the band structure; the H boundary
    (and the inter-image separators) are single zero rows in the input.
    """
    d = jnp.arange(3)[:, None, None, None, None]
    ri = jnp.arange(R)[None, :, None, None, None]
    wi = jnp.arange(Wd)[None, None, :, None, None]
    ro = jnp.arange(R)[None, None, None, :, None]
    wo = jnp.arange(Wd)[None, None, None, None, :]
    dy = (d - 1) * R + ri - ro + 1
    dx = wi - wo + 1
    valid = (dy >= 0) & (dy <= 2) & (dx >= 0) & (dx <= 2)
    taps = w_hwio[jnp.clip(dy, 0, 2), jnp.clip(dx, 0, 2)]   # (3,R,Wd,R,Wd,Ci,Co)
    taps = jnp.where(valid[..., None, None], taps, 0.0)
    Cin, Cout = w_hwio.shape[2], w_hwio.shape[3]
    return taps.transpose(0, 1, 2, 5, 3, 4, 6).reshape(
        3, R * Wd * Cin, R * Wd * Cout)


def _row_fold_factor(H, W, C):
    # Pack R image rows per kernel row so the lane dim is >= 128.
    # R == 1 at real ResNet widths (W*C >= 128).  Note: if W*C < 128 and H is
    # not cleanly divisible, L stays < 128 (correct but lane-sparse).
    R = 1
    while W * C * R < 128 and H % (2 * R) == 0:
        R *= 2
    return R


def _pick_images_per_step(N, S, L):
    """Pick Nb (divides N) so the matmul M-dim (= Nb*(S+1)-1) is tall enough
    to keep the MXU busy, without blowing VMEM; prefer >= 2 grid steps when a
    smaller packing still reaches the target (v7x has 2 TCs per chip)."""
    target_rows = 256
    # keep the packed f32 input block (double-buffered) under ~8 MiB
    max_rows = max(S + 2, (8 * 1024 * 1024) // (2 * L * 4))
    divisors = [d for d in range(1, N + 1) if N % d == 0]
    feasible = [d for d in divisors if d * (S + 1) + 1 <= max_rows] or [1]
    reaching = [d for d in feasible if d * (S + 1) - 1 >= target_rows]
    nb = min(reaching) if reaching else max(feasible)
    if N // nb < 2:
        smaller = [d for d in feasible
                   if N // d >= 2 and d * (S + 1) - 1 >= target_rows]
        if smaller:
            nb = max(smaller)
    return nb


def prepare_basic_block_params(x_shape, w1, g1, be1, m1, v1,
                               w2, g2, be2, m2, v2, eps=1e-5):
    """One-time (per-weights) preparation, hoisted out of the per-call forward:
    fuse inference BN into lane-tiled scale/bias and build the bf16 banded conv
    matrices (the gather it uses is more expensive than the kernel at scale)."""
    _, H, W, C = x_shape
    R = _row_fold_factor(H, W, C)
    L = R * W * C

    inv1 = jax.lax.rsqrt(v1 + eps)
    inv2 = jax.lax.rsqrt(v2 + eps)
    s1 = jnp.tile(g1 * inv1, R * W).reshape(1, L).astype(jnp.float32)
    b1 = jnp.tile(be1 - m1 * g1 * inv1, R * W).reshape(1, L).astype(jnp.float32)
    s2 = jnp.tile(g2 * inv2, R * W).reshape(1, L).astype(jnp.float32)
    b2 = jnp.tile(be2 - m2 * g2 * inv2, R * W).reshape(1, L).astype(jnp.float32)

    m1b = _band_matrices(w1, W, R).astype(jnp.bfloat16)
    m2b = _band_matrices(w2, W, R).astype(jnp.bfloat16)
    return m1b, s1, b1, m2b, s2, b2


@jax.jit
def basic_block_forward(x_nhwc, m1b, s1, b1, m2b, s2, b2):
    """x_nhwc: (N,H,W,C) f32.  Other args from prepare_basic_block_params.
    Returns (N,H,W,C) f32."""
    N, H, W, C = x_nhwc.shape
    L = s1.shape[-1]
    R = L // (W * C)
    S = H // R                       # folded rows per image

    Nb = _pick_images_per_step(N, S, L)
    nblk = N // Nb
    P = Nb * (S + 1) + 1             # packed rows per grid step
    M = P - 2                        # matmul M per conv

    # Fold rows, then pack Nb images per grid step with one zero separator row
    # after each image (plus one leading zero row) — the separators play the
    # role of the padding=1 H boundary for the band matrices.
    xf = x_nhwc.reshape(nblk, Nb, S, L)
    xp = jnp.pad(xf, ((0, 0), (0, 0), (0, 1), (0, 0)))
    xp = xp.reshape(nblk, Nb * (S + 1), L)
    xp = jnp.pad(xp, ((0, 0), (1, 0), (0, 0)))          # (nblk, P, L)

    # VMEM actually used per step (weights single-buffered, activations/outputs
    # double-buffered) + headroom above the default scoped limit.
    vmem_bytes = (2 * P * L * 4 + 2 * Nb * S * L * 4 +
                  2 * 3 * L * L * 2 + 4 * L * 4 + P * L * 4)
    vmem_limit = min(64 * 1024 * 1024,
                     max(32 * 1024 * 1024, (vmem_bytes * 3) // 2))

    cost = pl.CostEstimate(
        flops=2 * 2 * 3 * nblk * M * L * L,          # 2 convs x 3 taps
        transcendentals=0,
        bytes_accessed=(xp.size * 4 + N * S * L * 4 +
                        m1b.size * 2 + m2b.size * 2 + 4 * L * 4))

    kernel = functools.partial(_basic_block_kernel, nb=Nb)
    wmap = lambda n: (0, 0, 0)
    vmap_ = lambda n: (0, 0)

    out = pl.pallas_call(
        kernel,
        out_shape=jax.ShapeDtypeStruct((nblk, Nb * S, L), jnp.float32),
        grid_spec=pltpu.PrefetchScalarGridSpec(
            num_scalar_prefetch=0,
            grid=(nblk,),
            in_specs=[
                pl.BlockSpec((1, P, L), lambda n: (n, 0, 0)),              # xp
                # grid-invariant operands: single-buffered, fetched once
                pl.BlockSpec((3, L, L), wmap, pipeline_mode=pl.Buffered(1)),
                pl.BlockSpec((1, L), vmap_, pipeline_mode=pl.Buffered(1)),
                pl.BlockSpec((1, L), vmap_, pipeline_mode=pl.Buffered(1)),
                pl.BlockSpec((3, L, L), wmap, pipeline_mode=pl.Buffered(1)),
                pl.BlockSpec((1, L), vmap_, pipeline_mode=pl.Buffered(1)),
                pl.BlockSpec((1, L), vmap_, pipeline_mode=pl.Buffered(1)),
            ],
            out_specs=pl.BlockSpec((1, Nb * S, L), lambda n: (n, 0, 0)),
            scratch_shapes=[pltpu.VMEM((P, L), jnp.float32)],
        ),
        compiler_params=pltpu.CompilerParams(
            dimension_semantics=("parallel",),
            vmem_limit_bytes=int(vmem_limit)),
        cost_estimate=cost,
    )(xp, m1b, s1, b1, m2b, s2, b2)

    return out.reshape(N, H, W, C)


def _reference(x, w1, g1, be1, m1, v1, w2, g2, be2, m2, v2, eps=1e-5):
    dn = ("NHWC", "HWIO", "NHWC")
    y = jax.lax.conv_general_dilated(x, w1, (1, 1), "SAME", dimension_numbers=dn,
                                     precision=jax.lax.Precision.HIGHEST)
    y = (y - m1) * jax.lax.rsqrt(v1 + eps) * g1 + be1
    y = jnp.maximum(y, 0.0)
    y = jax.lax.conv_general_dilated(y, w2, (1, 1), "SAME", dimension_numbers=dn,
                                     precision=jax.lax.Precision.HIGHEST)
    y = (y - m2) * jax.lax.rsqrt(v2 + eps) * g2 + be2
    return jnp.maximum(y + x, 0.0)


if __name__ == "__main__":
    # Small shapes consistent with BasicBlock(inplanes=4, planes=4, stride=1).
    N, C, H, W = 2, 4, 16, 16

    key = jax.random.PRNGKey(0)
    (kx, kw1, kw2, kg1, kb1, km1, kv1,
     kg2, kb2, km2, kv2) = jax.random.split(key, 11)

    x_nchw = jax.random.normal(kx, (N, C, H, W), jnp.float32)
    x_nhwc = jnp.transpose(x_nchw, (0, 2, 3, 1))

    # conv3x3 weights (bias=False), HWIO layout.
    w1 = jax.random.normal(kw1, (3, 3, C, C), jnp.float32) * 0.1
    w2 = jax.random.normal(kw2, (3, 3, C, C), jnp.float32) * 0.1

    # BatchNorm params / running stats (inference form).
    g1 = 1.0 + 0.1 * jax.random.normal(kg1, (C,), jnp.float32)
    be1 = 0.1 * jax.random.normal(kb1, (C,), jnp.float32)
    m1 = 0.1 * jax.random.normal(km1, (C,), jnp.float32)
    v1 = 1.0 + 0.1 * jnp.abs(jax.random.normal(kv1, (C,), jnp.float32))
    g2 = 1.0 + 0.1 * jax.random.normal(kg2, (C,), jnp.float32)
    be2 = 0.1 * jax.random.normal(kb2, (C,), jnp.float32)
    m2 = 0.1 * jax.random.normal(km2, (C,), jnp.float32)
    v2 = 1.0 + 0.1 * jnp.abs(jax.random.normal(kv2, (C,), jnp.float32))

    # One-time parameter preparation (hoisted out of the per-call forward).
    params = prepare_basic_block_params(x_nhwc.shape, w1, g1, be1, m1, v1,
                                        w2, g2, be2, m2, v2)

    out = basic_block_forward(x_nhwc, *params)
    out = jax.block_until_ready(out)

    ref = _reference(x_nhwc, w1, g1, be1, m1, v1, w2, g2, be2, m2, v2)
    assert out.shape == (N, H, W, C)
    err = float(jnp.max(jnp.abs(out - ref)))
    # MXU operands (activations + weights) run in bf16 -> bf16-level tolerance
    # vs the HIGHEST-precision reference; the skip connection itself is f32.
    assert err < 5e-2, f"mismatch vs JAX reference: max abs err = {err}"

    print("KERNEL_OK")
</pallas_src>

<mosaic_0001>
module attributes {stable_mosaic.version = 11 : i64} {
  func.func @_basic_block_kernel(%arg0: i32, %arg1: memref<1x19x128xf32, #tpu.memory_space<vmem>>, %arg2: memref<3x128x128xbf16, #tpu.memory_space<vmem>>, %arg3: memref<1x128xf32, #tpu.memory_space<vmem>>, %arg4: memref<1x128xf32, #tpu.memory_space<vmem>>, %arg5: memref<3x128x128xbf16, #tpu.memory_space<vmem>>, %arg6: memref<1x128xf32, #tpu.memory_space<vmem>>, %arg7: memref<1x128xf32, #tpu.memory_space<vmem>>, %arg8: memref<1x16x128xf32, #tpu.memory_space<vmem>>, %arg9: memref<19x128xf32, #tpu.memory_space<vmem>>) attributes {dimension_semantics = [#tpu.dimension_semantics<parallel>], iteration_bounds = array<i64: 1>, scalar_prefetch = 0 : i64, scratch_operands = 1 : i64, tpu.core_type = #tpu.core_type<tc>, window_params = [{transform_indices = @transform_0, window_bounds = array<i64: 1, 19, 128>}, {pipeline_mode = #tpu.pipeline_mode<synchronous>, transform_indices = @transform_1, window_bounds = array<i64: 3, 128, 128>}, {pipeline_mode = #tpu.pipeline_mode<synchronous>, transform_indices = @transform_2, window_bounds = array<i64: 1, 128>}, {pipeline_mode = #tpu.pipeline_mode<synchronous>, transform_indices = @transform_3, window_bounds = array<i64: 1, 128>}, {pipeline_mode = #tpu.pipeline_mode<synchronous>, transform_indices = @transform_4, window_bounds = array<i64: 3, 128, 128>}, {pipeline_mode = #tpu.pipeline_mode<synchronous>, transform_indices = @transform_5, window_bounds = array<i64: 1, 128>}, {pipeline_mode = #tpu.pipeline_mode<synchronous>, transform_indices = @transform_6, window_bounds = array<i64: 1, 128>}, {transform_indices = @transform_7, window_bounds = array<i64: 1, 16, 128>}]} {
    %c0 = arith.constant 0 : index
    %c0_0 = arith.constant 0 : index
    %c0_1 = arith.constant 0 : index
    %0 = vector.load %arg1[%c0, %c0_0, %c0_1] : memref<1x19x128xf32, #tpu.memory_space<vmem>>, vector<1x19x128xf32>
    %1 = vector.shape_cast %0 : vector<1x19x128xf32> to vector<19x128xf32>
    %2 = arith.truncf %1 : vector<19x128xf32> to vector<19x128xbf16>
    %3 = vector.extract_strided_slice %2 {offsets = [0, 0], sizes = [17, 128], strides = [1, 1]} : vector<19x128xbf16> to vector<17x128xbf16>
    %c0_2 = arith.constant 0 : index
    %c0_3 = arith.constant 0 : index
    %c0_4 = arith.constant 0 : index
    %4 = vector.load %arg2[%c0_2, %c0_3, %c0_4] : memref<3x128x128xbf16, #tpu.memory_space<vmem>>, vector<1x128x128xbf16>
    %5 = vector.shape_cast %4 : vector<1x128x128xbf16> to vector<128x128xbf16>
    %cst = arith.constant dense<0.000000e+00> : vector<17x128xf32>
    %6 = tpu.matmul %3, %5, %cst {dimension_numbers = #tpu.dot_dimension_numbers<[1], [0], [0], [1], [0, 0, 1, 1], [], []>} : vector<17x128xbf16>, vector<128x128xbf16>, vector<17x128xf32> -> vector<17x128xf32>
    %7 = vector.extract_strided_slice %2 {offsets = [1, 0], sizes = [17, 128], strides = [1, 1]} : vector<19x128xbf16> to vector<17x128xbf16>
    %c1 = arith.constant 1 : index
    %c0_5 = arith.constant 0 : index
    %c0_6 = arith.constant 0 : index
    %8 = vector.load %arg2[%c1, %c0_5, %c0_6] : memref<3x128x128xbf16, #tpu.memory_space<vmem>>, vector<1x128x128xbf16>
    %9 = vector.shape_cast %8 : vector<1x128x128xbf16> to vector<128x128xbf16>
    %cst_7 = arith.constant dense<0.000000e+00> : vector<17x128xf32>
    %10 = tpu.matmul %7, %9, %cst_7 {dimension_numbers = #tpu.dot_dimension_numbers<[1], [0], [0], [1], [0, 0, 1, 1], [], []>} : vector<17x128xbf16>, vector<128x128xbf16>, vector<17x128xf32> -> vector<17x128xf32>
    %11 = arith.addf %6, %10 : vector<17x128xf32>
    %12 = vector.extract_strided_slice %2 {offsets = [2, 0], sizes = [17, 128], strides = [1, 1]} : vector<19x128xbf16> to vector<17x128xbf16>
    %c2 = arith.constant 2 : index
    %c0_8 = arith.constant 0 : index
    %c0_9 = arith.constant 0 : index
    %13 = vector.load %arg2[%c2, %c0_8, %c0_9] : memref<3x128x128xbf16, #tpu.memory_space<vmem>>, vector<1x128x128xbf16>
    %14 = vector.shape_cast %13 : vector<1x128x128xbf16> to vector<128x128xbf16>
    %cst_10 = arith.constant dense<0.000000e+00> : vector<17x128xf32>
    %15 = tpu.matmul %12, %14, %cst_10 {dimension_numbers = #tpu.dot_dimension_numbers<[1], [0], [0], [1], [0, 0, 1, 1], [], []>} : vector<17x128xbf16>, vector<128x128xbf16>, vector<17x128xf32> -> vector<17x128xf32>
    %16 = arith.addf %11, %15 : vector<17x128xf32>
    %c0_11 = arith.constant 0 : index
    %c0_12 = arith.constant 0 : index
    %17 = vector.load %arg3[%c0_11, %c0_12] : memref<1x128xf32, #tpu.memory_space<vmem>>, vector<1x128xf32>
    %18 = vector.broadcast %17 : vector<1x128xf32> to vector<17x128xf32>
    %19 = arith.mulf %16, %18 : vector<17x128xf32>
    %c0_13 = arith.constant 0 : index
    %c0_14 = arith.constant 0 : index
    %20 = vector.load %arg4[%c0_13, %c0_14] : memref<1x128xf32, #tpu.memory_space<vmem>>, vector<1x128xf32>
    %21 = vector.broadcast %20 : vector<1x128xf32> to vector<17x128xf32>
    %22 = arith.addf %19, %21 : vector<17x128xf32>
    %cst_15 = arith.constant 0.000000e+00 : f32
    %23 = vector.broadcast %cst_15 : f32 to vector<17x128xf32>
    %24 = arith.maximumf %22, %23 : vector<17x128xf32>
    %25 = tpu.iota {dimensions = array<i32: 0>} : vector<17x1xi32>
    %c1_i32 = arith.constant 1 : i32
    %26 = vector.broadcast %c1_i32 : i32 to vector<17x1xi32>
    %27 = arith.addi %25, %26 : vector<17x1xi32>
    %c9_i32 = arith.constant 9 : i32
    %c0_i32 = arith.constant 0 : i32
    %28 = arith.cmpi eq, %c9_i32, %c0_i32 : i32
    %c1_i32_16 = arith.constant 1 : i32
    %29 = arith.select %28, %c1_i32_16, %c9_i32 : i32
    %30 = vector.broadcast %29 : i32 to vector<17x1xi32>
    %31 = arith.remsi %27, %30 : vector<17x1xi32>
    %c0_i32_17 = arith.constant 0 : i32
    %32 = vector.broadcast %c0_i32_17 : i32 to vector<17x1xi32>
    %33 = arith.cmpi ne, %31, %32 : vector<17x1xi32>
    %c0_i32_18 = arith.constant 0 : i32
    %34 = vector.broadcast %c0_i32_18 : i32 to vector<17x1xi32>
    %35 = arith.cmpi slt, %31, %34 : vector<17x1xi32>
    %c0_i32_19 = arith.constant 0 : i32
    %36 = arith.cmpi slt, %29, %c0_i32_19 : i32
    %37 = vector.broadcast %36 : i1 to vector<17x1xi1>
    %38 = vector.broadcast %37 : vector<17x1xi1> to vector<17x1xi1>
    %39 = arith.xori %35, %38 : vector<17x1xi1>
    %40 = arith.andi %39, %33 : vector<17x1xi1>
    %41 = vector.broadcast %29 : i32 to vector<17x1xi32>
    %42 = arith.addi %31, %41 : vector<17x1xi32>
    %43 = arith.select %40, %42, %31 : vector<17x1xi1>, vector<17x1xi32>
    %c0_i32_20 = arith.constant 0 : i32
    %44 = vector.broadcast %c0_i32_20 : i32 to vector<17x1xi32>
    %45 = arith.cmpi eq, %43, %44 : vector<17x1xi32>
    %cst_21 = arith.constant 0.000000e+00 : f32
    %46 = vector.shape_cast %45 : vector<17x1xi1> to vector<17x1xi1>
    %47 = vector.broadcast %46 : vector<17x1xi1> to vector<17x128xi1>
    %48 = vector.broadcast %cst_21 : f32 to vector<17x128xf32>
    %49 = arith.select %47, %48, %24 : vector<17x128xi1>, vector<17x128xf32>
    %cst_22 = arith.constant 0.000000e+00 : f32
    %50 = vector.broadcast %cst_22 : f32 to vector<1x128xf32>
    %c0_23 = arith.constant 0 : index
    %c0_24 = arith.constant 0 : index
    %51 = vector.load %arg9[%c0_23, %c0_24] : memref<19x128xf32, #tpu.memory_space<vmem>>, vector<1x128xf32>
    tpu.vector_store %arg9[%c0_23, %c0_24], %50 {strides = array<i32>} : memref<19x128xf32, #tpu.memory_space<vmem>>, vector<1x128xf32>,
    %cst_25 = arith.constant 0.000000e+00 : f32
    %52 = vector.broadcast %cst_25 : f32 to vector<1x128xf32>
    %c18 = arith.constant 18 : index
    %c0_26 = arith.constant 0 : index
    %53 = vector.load %arg9[%c18, %c0_26] : memref<19x128xf32, #tpu.memory_space<vmem>>, vector<1x128xf32>
    tpu.vector_store %arg9[%c18, %c0_26], %52 {strides = array<i32>} : memref<19x128xf32, #tpu.memory_space<vmem>>, vector<1x128xf32>,
    %c1_27 = arith.constant 1 : index
    %c0_28 = arith.constant 0 : index
    %54 = vector.load %arg9[%c1_27, %c0_28] : memref<19x128xf32, #tpu.memory_space<vmem>>, vector<17x128xf32>
    tpu.vector_store %arg9[%c1_27, %c0_28], %49 {strides = array<i32>} : memref<19x128xf32, #tpu.memory_space<vmem>>, vector<17x128xf32>,
    %c0_29 = arith.constant 0 : index
    %c0_30 = arith.constant 0 : index
    %55 = vector.load %arg9[%c0_29, %c0_30] : memref<19x128xf32, #tpu.memory_space<vmem>>, vector<19x128xf32>
    %56 = arith.truncf %55 : vector<19x128xf32> to vector<19x128xbf16>
    %57 = vector.extract_strided_slice %56 {offsets = [0, 0], sizes = [17, 128], strides = [1, 1]} : vector<19x128xbf16> to vector<17x128xbf16>
    %c0_31 = arith.constant 0 : index
    %c0_32 = arith.constant 0 : index
    %c0_33 = arith.constant 0 : index
    %58 = vector.load %arg5[%c0_31, %c0_32, %c0_33] : memref<3x128x128xbf16, #tpu.memory_space<vmem>>, vector<1x128x128xbf16>
    %59 = vector.shape_cast %58 : vector<1x128x128xbf16> to vector<128x128xbf16>
    %cst_34 = arith.constant dense<0.000000e+00> : vector<17x128xf32>
    %60 = tpu.matmul %57, %59, %cst_34 {dimension_numbers = #tpu.dot_dimension_numbers<[1], [0], [0], [1], [0, 0, 1, 1], [], []>} : vector<17x128xbf16>, vector<128x128xbf16>, vector<17x128xf32> -> vector<17x128xf32>
    %61 = vector.extract_strided_slice %56 {offsets = [1, 0], sizes = [17, 128], strides = [1, 1]} : vector<19x128xbf16> to vector<17x128xbf16>
    %c1_35 = arith.constant 1 : index
    %c0_36 = arith.constant 0 : index
    %c0_37 = arith.constant 0 : index
    %62 = vector.load %arg5[%c1_35, %c0_36, %c0_37] : memref<3x128x128xbf16, #tpu.memory_space<vmem>>, vector<1x128x128xbf16>
    %63 = vector.shape_cast %62 : vector<1x128x128xbf16> to vector<128x128xbf16>
    %cst_38 = arith.constant dense<0.000000e+00> : vector<17x128xf32>
    %64 = tpu.matmul %61, %63, %cst_38 {dimension_numbers = #tpu.dot_dimension_numbers<[1], [0], [0], [1], [0, 0, 1, 1], [], []>} : vector<17x128xbf16>, vector<128x128xbf16>, vector<17x128xf32> -> vector<17x128xf32>
    %65 = arith.addf %60, %64 : vector<17x128xf32>
    %66 = vector.extract_strided_slice %56 {offsets = [2, 0], sizes = [17, 128], strides = [1, 1]} : vector<19x128xbf16> to vector<17x128xbf16>
    %c2_39 = arith.constant 2 : index
    %c0_40 = arith.constant 0 : index
    %c0_41 = arith.constant 0 : index
    %67 = vector.load %arg5[%c2_39, %c0_40, %c0_41] : memref<3x128x128xbf16, #tpu.memory_space<vmem>>, vector<1x128x128xbf16>
    %68 = vector.shape_cast %67 : vector<1x128x128xbf16> to vector<128x128xbf16>
    %cst_42 = arith.constant dense<0.000000e+00> : vector<17x128xf32>
    %69 = tpu.matmul %66, %68, %cst_42 {dimension_numbers = #tpu.dot_dimension_numbers<[1], [0], [0], [1], [0, 0, 1, 1], [], []>} : vector<17x128xbf16>, vector<128x128xbf16>, vector<17x128xf32> -> vector<17x128xf32>
    %70 = arith.addf %65, %69 : vector<17x128xf32>
    %71 = vector.extract_strided_slice %70 {offsets = [0, 0], sizes = [8, 128], strides = [1, 1]} : vector<17x128xf32> to vector<8x128xf32>
    %c0_43 = arith.constant 0 : index
    %c0_44 = arith.constant 0 : index
    %72 = vector.load %arg6[%c0_43, %c0_44] : memref<1x128xf32, #tpu.memory_space<vmem>>, vector<1x128xf32>
    %73 = vector.broadcast %72 : vector<1x128xf32> to vector<8x128xf32>
    %74 = arith.mulf %71, %73 : vector<8x128xf32>
    %c0_45 = arith.constant 0 : index
    %c0_46 = arith.constant 0 : index
    %75 = vector.load %arg7[%c0_45, %c0_46] : memref<1x128xf32, #tpu.memory_space<vmem>>, vector<1x128xf32>
    %76 = vector.broadcast %75 : vector<1x128xf32> to vector<8x128xf32>
    %77 = arith.addf %74, %76 : vector<8x128xf32>
    %c0_47 = arith.constant 0 : index
    %c1_48 = arith.constant 1 : index
    %c0_49 = arith.constant 0 : index
    %78 = vector.load %arg1[%c0_47, %c1_48, %c0_49] : memref<1x19x128xf32, #tpu.memory_space<vmem>>, vector<1x8x128xf32>
    %79 = vector.shape_cast %78 : vector<1x8x128xf32> to vector<8x128xf32>
    %80 = arith.addf %77, %79 : vector<8x128xf32>
    %cst_50 = arith.constant 0.000000e+00 : f32
    %81 = vector.broadcast %cst_50 : f32 to vector<8x128xf32>
    %82 = arith.maximumf %80, %81 : vector<8x128xf32>
    %c0_51 = arith.constant 0 : index
    %c0_52 = arith.constant 0 : index
    %c0_53 = arith.constant 0 : index
    %83 = vector.load %arg8[%c0_51, %c0_52, %c0_53] : memref<1x16x128xf32, #tpu.memory_space<vmem>>, vector<1x8x128xf32>
    %84 = vector.shape_cast %83 : vector<1x8x128xf32> to vector<8x128xf32>
    %85 = vector.shape_cast %82 : vector<8x128xf32> to vector<1x8x128xf32>
    tpu.vector_store %arg8[%c0_51, %c0_52, %c0_53], %85 {strides = array<i32>} : memref<1x16x128xf32, #tpu.memory_space<vmem>>, vector<1x8x128xf32>,
    %86 = vector.extract_strided_slice %70 {offsets = [9, 0], sizes = [8, 128], strides = [1, 1]} : vector<17x128xf32> to vector<8x128xf32>
    %c0_54 = arith.constant 0 : index
    %c0_55 = arith.constant 0 : index
    %87 = vector.load %arg6[%c0_54, %c0_55] : memref<1x128xf32, #tpu.memory_space<vmem>>, vector<1x128xf32>
    %88 = vector.broadcast %87 : vector<1x128xf32> to vector<8x128xf32>
    %89 = arith.mulf %86, %88 : vector<8x128xf32>
    %c0_56 = arith.constant 0 : index
    %c0_57 = arith.constant 0 : index
    %90 = vector.load %arg7[%c0_56, %c0_57] : memref<1x128xf32, #tpu.memory_space<vmem>>, vector<1x128xf32>
    %91 = vector.broadcast %90 : vector<1x128xf32> to vector<8x128xf32>
    %92 = arith.addf %89, %91 : vector<8x128xf32>
    %c0_58 = arith.constant 0 : index
    %c10 = arith.constant 10 : index
    %c0_59 = arith.constant 0 : index
    %93 = vector.load %arg1[%c0_58, %c10, %c0_59] : memref<1x19x128xf32, #tpu.memory_space<vmem>>, vector<1x8x128xf32>
    %94 = vector.shape_cast %93 : vector<1x8x128xf32> to vector<8x128xf32>
    %95 = arith.addf %92, %94 : vector<8x128xf32>
    %cst_60 = arith.constant 0.000000e+00 : f32
    %96 = vector.broadcast %cst_60 : f32 to vector<8x128xf32>
    %97 = arith.maximumf %95, %96 : vector<8x128xf32>
    %c0_61 = arith.constant 0 : index
    %c8 = arith.constant 8 : index
    %c0_62 = arith.constant 0 : index
    %98 = vector.load %arg8[%c0_61, %c8, %c0_62] : memref<1x16x128xf32, #tpu.memory_space<vmem>>, vector<1x8x128xf32>
    %99 = vector.shape_cast %98 : vector<1x8x128xf32> to vector<8x128xf32>
    %100 = vector.shape_cast %97 : vector<8x128xf32> to vector<1x8x128xf32>
    tpu.vector_store %arg8[%c0_61, %c8, %c0_62], %100 {strides = array<i32>} : memref<1x16x128xf32, #tpu.memory_space<vmem>>, vector<1x8x128xf32>,
    return
  }
  func.func @transform_0(%arg0: i32) -> (i32, i32, i32) {
    %c0_i32 = arith.constant 0 : i32
    %c0_i32_0 = arith.constant 0 : i32
    %c0_i32_1 = arith.constant 0 : i32
    return %arg0, %c0_i32, %c0_i32_0 : i32, i32, i32
  }
  func.func @transform_1(%arg0: i32) -> (i32, i32, i32) {
    %c0_i32 = arith.constant 0 : i32
    %c0_i32_0 = arith.constant 0 : i32
    %c0_i32_1 = arith.constant 0 : i32
    %c0_i32_2 = arith.constant 0 : i32
    return %c0_i32, %c0_i32_0, %c0_i32_1 : i32, i32, i32
  }
  func.func @transform_2(%arg0: i32) -> (i32, i32) {
    %c0_i32 = arith.constant 0 : i32
    %c0_i32_0 = arith.constant 0 : i32
    %c0_i32_1 = arith.constant 0 : i32
    return %c0_i32, %c0_i32_0 : i32, i32
  }
  func.func @transform_3(%arg0: i32) -> (i32, i32) {
    %c0_i32 = arith.constant 0 : i32
    %c0_i32_0 = arith.constant 0 : i32
    %c0_i32_1 = arith.constant 0 : i32
    return %c0_i32, %c0_i32_0 : i32, i32
  }
  func.func @transform_4(%arg0: i32) -> (i32, i32, i32) {
    %c0_i32 = arith.constant 0 : i32
    %c0_i32_0 = arith.constant 0 : i32
    %c0_i32_1 = arith.constant 0 : i32
    %c0_i32_2 = arith.constant 0 : i32
    return %c0_i32, %c0_i32_0, %c0_i32_1 : i32, i32, i32
  }
  func.func @transform_5(%arg0: i32) -> (i32, i32) {
    %c0_i32 = arith.constant 0 : i32
    %c0_i32_0 = arith.constant 0 : i32
    %c0_i32_1 = arith.constant 0 : i32
    return %c0_i32, %c0_i32_0 : i32, i32
  }
  func.func @transform_6(%arg0: i32) -> (i32, i32) {
    %c0_i32 = arith.constant 0 : i32
    %c0_i32_0 = arith.constant 0 : i32
    %c0_i32_1 = arith.constant 0 : i32
    return %c0_i32, %c0_i32_0 : i32, i32
  }
  func.func @transform_7(%arg0: i32) -> (i32, i32, i32) {
    %c0_i32 = arith.constant 0 : i32
    %c0_i32_0 = arith.constant 0 : i32
    %c0_i32_1 = arith.constant 0 : i32
    return %arg0, %c0_i32, %c0_i32_0 : i32, i32, i32
  }
}

</mosaic_0001>

<llo_original>
// kernel: basic_block_forward.1
$region0: #{basic_block_forward.1}
  #allocation0 [shape = 'u32[]', space=smem, size = 0x4, offset = 0x4, fixed_abs, tag = 'smem constant byte address 0x4 - core index']
  #allocation1 [shape = 'u32[144,128]{1,0:T(1,128)}', space=vmem, size = 0x12000, scoped, tag = 'internal scratch']
  #allocation2 [shape = 'f32[19,128]{1,0:T(8,128)}', space=vmem, size = 0x3000, scoped, tag = 'scratch operand']
  %s0 = inlined_call_operand.vmem [shape: f32[1,19,128], index: 0, kind: input, shape index: {}]
  %s1 = inlined_call_operand.vmem [shape: bf16[3,128,128], index: 1, kind: input, shape index: {}]
  %s2 = inlined_call_operand.vmem [shape: f32[1,128], index: 2, kind: input, shape index: {}]
  %s3 = inlined_call_operand.vmem [shape: f32[1,128], index: 3, kind: input, shape index: {}]
  %s4 = inlined_call_operand.vmem [shape: bf16[3,128,128], index: 4, kind: input, shape index: {}]
  %s5 = inlined_call_operand.vmem [shape: f32[1,128], index: 5, kind: input, shape index: {}]
  %s6 = inlined_call_operand.vmem [shape: f32[1,128], index: 6, kind: input, shape index: {}]
  %s7 = inlined_call_operand.vmem [shape: f32[1,16,128], index: 7, kind: output, shape index: {}]
  %s8 = sld [smem:[#allocation0]]
  $region38: #{basic_block_forward.1} parent=0
    _
  %s10 = ssub.s32 1, %s8
  %s11 = scalar_select 0, %s10, %s8
  // Predicated region
  $region2: #{basic_block_forward.1} parent=0 // pred_check
    _
  $region3: #{basic_block_forward.1} parent=0 // pred_check_branch
    %13 = sbr.rel (0) target = $region5
  $region4: #{basic_block_forward.1} parent=0 // pred_region
    _
  $region5: #{basic_block_forward.1} parent=0 // pred_fallthru
    _
  // Predicated region
  $region6: #{basic_block_forward.1} parent=0 // pred_check
    _
  $region7: #{basic_block_forward.1} parent=0 // pred_check_branch
    %15 = sbr.rel (0) target = $region9
  $region8: #{basic_block_forward.1} parent=0 // pred_region
    _
  $region9: #{basic_block_forward.1} parent=0 // pred_fallthru
    _
  // Predicated region
  $region10: #{basic_block_forward.1} parent=0 // pred_check
    _
  $region11: #{basic_block_forward.1} parent=0 // pred_check_branch
    %17 = sbr.rel (0) target = $region13
  $region12: #{basic_block_forward.1} parent=0 // pred_region
    _
  $region13: #{basic_block_forward.1} parent=0 // pred_fallthru
    _
  // Predicated region
  $region14: #{basic_block_forward.1} parent=0 // pred_check
    _
  $region15: #{basic_block_forward.1} parent=0 // pred_check_branch
    %19 = sbr.rel (0) target = $region17
  $region16: #{basic_block_forward.1} parent=0 // pred_region
    _
  $region17: #{basic_block_forward.1} parent=0 // pred_fallthru
    _
  // Predicated region
  $region18: #{basic_block_forward.1} parent=0 // pred_check
    _
  $region19: #{basic_block_forward.1} parent=0 // pred_check_branch
    %21 = sbr.rel (0) target = $region21
  $region20: #{basic_block_forward.1} parent=0 // pred_region
    _
  $region21: #{basic_block_forward.1} parent=0 // pred_fallthru
    _
  // Predicated region
  $region22: #{basic_block_forward.1} parent=0 // pred_check
    _
  $region23: #{basic_block_forward.1} parent=0 // pred_check_branch
    %23 = sbr.rel (0) target = $region25
  $region24: #{basic_block_forward.1} parent=0 // pred_region
    _
  $region25: #{basic_block_forward.1} parent=0 // pred_fallthru
    _
  // Predicated region
  $region26: #{basic_block_forward.1} parent=0 // pred_check
    _
  $region27: #{basic_block_forward.1} parent=0 // pred_check_branch
    %25 = sbr.rel (0) target = $region29
  $region28: #{basic_block_forward.1} parent=0 // pred_region
    _
  $region29: #{basic_block_forward.1} parent=0 // pred_fallthru
    _
  %v27 = vld [vmem:[%s0] sm:$0xff]
  %v28 = vld [vmem:[%s0 + $0x8] sm:$0xff]
  %v29 = vld [vmem:[%s0 + $0x10] sm:$0x7]
  %v30 = vpack.c.bf16 %v28, %v27
  %v31 = vpack.c.bf16 %v29, %v29
  %v32 = vld [vmem:[%s1] sm:$0xf]
  %v33 = vld [vmem:[%s1 + $0x4] sm:$0xf]
  %v34 = vld [vmem:[%s1 + $0x8] sm:$0xf]
  %v35 = vld [vmem:[%s1 + $0xc] sm:$0xf]
  %v36 = vld [vmem:[%s1 + $0x10] sm:$0xf]
  %v37 = vld [vmem:[%s1 + $0x14] sm:$0xf]
  %v38 = vld [vmem:[%s1 + $0x18] sm:$0xf]
  %v39 = vld [vmem:[%s1 + $0x1c] sm:$0xf]
  %v40 = vld [vmem:[%s1 + $0x20] sm:$0xf]
  %v41 = vld [vmem:[%s1 + $0x24] sm:$0xf]
  %v42 = vld [vmem:[%s1 + $0x28] sm:$0xf]
  %v43 = vld [vmem:[%s1 + $0x2c] sm:$0xf]
  %v44 = vld [vmem:[%s1 + $0x30] sm:$0xf]
  %v45 = vld [vmem:[%s1 + $0x34] sm:$0xf]
  %v46 = vld [vmem:[%s1 + $0x38] sm:$0xf]
  %v47 = vld [vmem:[%s1 + $0x3c] sm:$0xf]
  %s48 = scalar_lea.vmem %s1, 64
  %v49 = vld [vmem:[%s48] sm:$0xf]
  %v50 = vld [vmem:[%s48 + $0x4] sm:$0xf]
  %v51 = vld [vmem:[%s48 + $0x8] sm:$0xf]
  %v52 = vld [vmem:[%s48 + $0xc] sm:$0xf]
  %v53 = vld [vmem:[%s48 + $0x10] sm:$0xf]
  %v54 = vld [vmem:[%s48 + $0x14] sm:$0xf]
  %v55 = vld [vmem:[%s48 + $0x18] sm:$0xf]
  %v56 = vld [vmem:[%s48 + $0x1c] sm:$0xf]
  %v57 = vld [vmem:[%s48 + $0x20] sm:$0xf]
  %v58 = vld [vmem:[%s48 + $0x24] sm:$0xf]
  %v59 = vld [vmem:[%s48 + $0x28] sm:$0xf]
  %v60 = vld [vmem:[%s48 + $0x2c] sm:$0xf]
  %v61 = vld [vmem:[%s48 + $0x30] sm:$0xf]
  %v62 = vld [vmem:[%s48 + $0x34] sm:$0xf]
  %v63 = vld [vmem:[%s48 + $0x38] sm:$0xf]
  %v64 = vld [vmem:[%s48 + $0x3c] sm:$0xf]
  %vm65 = vsmask.f32 7424
  %v67 = vshrl.u32 %v30, 16
  %v69 = vshll.u32 %v30, 16
  %v71 = vrot.slane %v69, 1
  %v72 = vor.u32 %v67, %v71
  %v74 = vshll.u32 %v31, 16
  %v76 = vrot.slane %v74, 1
  %v77 = vsel %vm65, %v72, %v76
  %v78 = vshrl.u32 %v31, 16
  %v98 = vunpack.c.l.b16 %v49
  %v99 = vunpack.c.l.b16 %v50
  %v100 = vunpack.c.l.b16 %v51
  %v101 = vunpack.c.l.b16 %v52
  %v102 = vunpack.c.l.b16 %v53
  %v103 = vunpack.c.l.b16 %v54
  %v104 = vunpack.c.l.b16 %v55
  %v105 = vunpack.c.l.b16 %v56
  %v106 = vunpack.c.l.b16 %v57
  %v107 = vunpack.c.l.b16 %v58
  %v108 = vunpack.c.l.b16 %v59
  %v109 = vunpack.c.l.b16 %v60
  %v110 = vunpack.c.l.b16 %v61
  %v111 = vunpack.c.l.b16 %v62
  %v112 = vunpack.c.l.b16 %v63
  %v113 = vunpack.c.l.b16 %v64
  %v114 = vpack.c.b16 %v99, %v98
  %v115 = vpack.c.b16 %v101, %v100
  %v116 = vpack.c.b16 %v103, %v102
  %v117 = vpack.c.b16 %v105, %v104
  %v118 = vpack.c.b16 %v107, %v106
  %v119 = vpack.c.b16 %v109, %v108
  %v120 = vpack.c.b16 %v111, %v110
  %v121 = vpack.c.b16 %v113, %v112
  %130 = vmatprep.subr.bf16.mxu0 0
  %131 = vmatpush1.bf16.msra.mxu0 %v114
  %132 = vmatprep.subr.bf16.mxu0 0
  %133 = vmatpush1.bf16.msra.mxu0 %v115
  %134 = vmatprep.subr.bf16.mxu0 0
  %135 = vmatpush1.bf16.msra.mxu0 %v116
  %136 = vmatprep.subr.bf16.mxu0 0
  %137 = vmatpush1.bf16.msra.mxu0 %v117
  %138 = vmatprep.subr.bf16.mxu0 0
  %139 = vmatpush1.bf16.msra.mxu0 %v118
  %140 = vmatprep.subr.bf16.mxu0 0
  %141 = vmatpush1.bf16.msra.mxu0 %v119
  %142 = vmatprep.subr.bf16.mxu0 0
  %143 = vmatpush1.bf16.msra.mxu0 %v120
  %144 = vmatprep.subr.bf16.mxu0 0
  %145 = vmatpush1.bf16.msra.mxu0 %v121
  %146 = vmatprep.subr.bf16.mxu0 0
  %147 = vmatpush1.bf16.msra.mxu0 0
  %148 = vmatprep.subr.bf16.mxu0 0
  %149 = vmatpush1.bf16.msra.mxu0 0
  %150 = vmatprep.subr.bf16.mxu0 0
  %151 = vmatpush1.bf16.msra.mxu0 0
  %152 = vmatprep.subr.bf16.mxu0 0
  %153 = vmatpush1.bf16.msra.mxu0 0
  %154 = vmatprep.subr.bf16.mxu0 0
  %155 = vmatpush1.bf16.msra.mxu0 0
  %156 = vmatprep.subr.bf16.mxu0 0
  %157 = vmatpush1.bf16.msra.mxu0 0
  %158 = vmatprep.subr.bf16.mxu0 0
  %159 = vmatpush1.bf16.msra.mxu0 0
  %160 = vmatprep.subr.bf16.mxu0 0
  %161 = vmatpush1.bf16.msra.mxu0 0
  %162 = vmatprep.mubr.bf16.mxu0 0
  %163 = vmatmul.mubr.bf16.gmra.mrb[0].mxu0 %v77
  %v164 = vpop.f32.mrb[0].mxu0
  %v165 = vadd.f32 0.0, %v164
  %v166 = vpop.f32.mrb[0].mxu0
  %v167 = vpop.f32.mrb[0].mxu0
  %v168 = vadd.f32 0.0, %v167
  %v169 = vpop.f32.mrb[0].mxu0
  %170 = vmatprep.mubr.bf16.mxu0 0
  %171 = vmatmul.mubr.bf16.gmra.mrb[0].mxu0 %v78
  %v172 = vpop.f32.mrb[0].mxu0
  %v173 = vadd.f32 0.0, %v172
  %v174 = vpop.f32.mrb[0].mxu0
  %v175 = vpop.f32.mrb[0].mxu0
  %v176 = vpop.f32.mrb[0].mxu0
  %177 = vdwg.mxu0
  %v194 = vunpack.c.l.b16 %v32
  %v195 = vunpack.c.l.b16 %v33
  %v196 = vunpack.c.l.b16 %v34
  %v197 = vunpack.c.l.b16 %v35
  %v198 = vunpack.c.l.b16 %v36
  %v199 = vunpack.c.l.b16 %v37
  %v200 = vunpack.c.l.b16 %v38
  %v201 = vunpack.c.l.b16 %v39
  %v202 = vunpack.c.l.b16 %v40
  %v203 = vunpack.c.l.b16 %v41
  %v204 = vunpack.c.l.b16 %v42
  %v205 = vunpack.c.l.b16 %v43
  %v206 = vunpack.c.l.b16 %v44
  %v207 = vunpack.c.l.b16 %v45
  %v208 = vunpack.c.l.b16 %v46
  %v209 = vunpack.c.l.b16 %v47
  %v210 = vpack.c.b16 %v195, %v194
  %v211 = vpack.c.b16 %v197, %v196
  %v212 = vpack.c.b16 %v199, %v198
  %v213 = vpack.c.b16 %v201, %v200
  %v214 = vpack.c.b16 %v203, %v202
  %v215 = vpack.c.b16 %v205, %v204
  %v216 = vpack.c.b16 %v207, %v206
  %v217 = vpack.c.b16 %v209, %v208
  %226 = vmatprep.subr.bf16.mxu0 0
  %227 = vmatpush1.bf16.msra.mxu0 %v210
  %228 = vmatprep.subr.bf16.mxu0 0
  %229 = vmatpush1.bf16.msra.mxu0 %v211
  %230 = vmatprep.subr.bf16.mxu0 0
  %231 = vmatpush1.bf16.msra.mxu0 %v212
  %232 = vmatprep.subr.bf16.mxu0 0
  %233 = vmatpush1.bf16.msra.mxu0 %v213
  %234 = vmatprep.subr.bf16.mxu0 0
  %235 = vmatpush1.bf16.msra.mxu0 %v214
  %236 = vmatprep.subr.bf16.mxu0 0
  %237 = vmatpush1.bf16.msra.mxu0 %v215
  %238 = vmatprep.subr.bf16.mxu0 0
  %239 = vmatpush1.bf16.msra.mxu0 %v216
  %240 = vmatprep.subr.bf16.mxu0 0
  %241 = vmatpush1.bf16.msra.mxu0 %v217
  %242 = vmatprep.subr.bf16.mxu0 0
  %243 = vmatpush1.bf16.msra.mxu0 0
  %244 = vmatprep.subr.bf16.mxu0 0
  %245 = vmatpush1.bf16.msra.mxu0 0
  %246 = vmatprep.subr.bf16.mxu0 0
  %247 = vmatpush1.bf16.msra.mxu0 0
  %248 = vmatprep.subr.bf16.mxu0 0
  %249 = vmatpush1.bf16.msra.mxu0 0
  %250 = vmatprep.subr.bf16.mxu0 0
  %251 = vmatpush1.bf16.msra.mxu0 0
  %252 = vmatprep.subr.bf16.mxu0 0
  %253 = vmatpush1.bf16.msra.mxu0 0
  %254 = vmatprep.subr.bf16.mxu0 0
  %255 = vmatpush1.bf16.msra.mxu0 0
  %256 = vmatprep.subr.bf16.mxu0 0
  %257 = vmatpush1.bf16.msra.mxu0 0
  %258 = vmatprep.mubr.bf16.mxu0 0
  %259 = vmatmul.mubr.bf16.gmra.mrb[0].mxu0 %v30
  %v260 = vpop.f32.mrb[0].mxu0
  %v261 = vadd.f32 %v165, %v260
  %v262 = vpop.f32.mrb[0].mxu0
  %v263 = vpop.f32.mrb[0].mxu0
  %v264 = vadd.f32 %v168, %v263
  %v265 = vpop.f32.mrb[0].mxu0
  %266 = vmatprep.mubr.bf16.mxu0 0
  %267 = vmatmul.mubr.bf16.gmra.mrb[0].mxu0 %v31
  %v268 = vpop.f32.mrb[0].mxu0
  %v269 = vadd.f32 %v173, %v268
  %v270 = vpop.f32.mrb[0].mxu0
  %v271 = vpop.f32.mrb[0].mxu0
  %v272 = vpop.f32.mrb[0].mxu0
  %273 = vdwg.mxu0
  %s274 = scalar_lea.vmem %s1, 128
  %v275 = vld [vmem:[%s274] sm:$0xf]
  %v276 = vld [vmem:[%s274 + $0x4] sm:$0xf]
  %v277 = vld [vmem:[%s274 + $0x8] sm:$0xf]
  %v278 = vld [vmem:[%s274 + $0xc] sm:$0xf]
  %v279 = vld [vmem:[%s274 + $0x10] sm:$0xf]
  %v280 = vld [vmem:[%s274 + $0x14] sm:$0xf]
  %v281 = vld [vmem:[%s274 + $0x18] sm:$0xf]
  %v282 = vld [vmem:[%s274 + $0x1c] sm:$0xf]
  %v283 = vld [vmem:[%s274 + $0x20] sm:$0xf]
  %v284 = vld [vmem:[%s274 + $0x24] sm:$0xf]
  %v285 = vld [vmem:[%s274 + $0x28] sm:$0xf]
  %v286 = vld [vmem:[%s274 + $0x2c] sm:$0xf]
  %v287 = vld [vmem:[%s274 + $0x30] sm:$0xf]
  %v288 = vld [vmem:[%s274 + $0x34] sm:$0xf]
  %v289 = vld [vmem:[%s274 + $0x38] sm:$0xf]
  %v290 = vld [vmem:[%s274 + $0x3c] sm:$0xf]
  %vm293 = vcmask 1046528
  %v294 = vrot.slane %v30, 1
  %v295 = vrot.slane %v31, 1
  %v296 = vsel %vm293, %v294, %v295
  %v315 = vunpack.c.l.b16 %v275
  %v316 = vunpack.c.l.b16 %v276
  %v317 = vunpack.c.l.b16 %v277
  %v318 = vunpack.c.l.b16 %v278
  %v319 = vunpack.c.l.b16 %v279
  %v320 = vunpack.c.l.b16 %v280
  %v321 = vunpack.c.l.b16 %v281
  %v322 = vunpack.c.l.b16 %v282
  %v323 = vunpack.c.l.b16 %v283
  %v324 = vunpack.c.l.b16 %v284
  %v325 = vunpack.c.l.b16 %v285
  %v326 = vunpack.c.l.b16 %v286
  %v327 = vunpack.c.l.b16 %v287
  %v328 = vunpack.c.l.b16 %v288
  %v329 = vunpack.c.l.b16 %v289
  %v330 = vunpack.c.l.b16 %v290
  %v331 = vpack.c.b16 %v316, %v315
  %v332 = vpack.c.b16 %v318, %v317
  %v333 = vpack.c.b16 %v320, %v319
  %v334 = vpack.c.b16 %v322, %v321
  %v335 = vpack.c.b16 %v324, %v323
  %v336 = vpack.c.b16 %v326, %v325
  %v337 = vpack.c.b16 %v328, %v327
  %v338 = vpack.c.b16 %v330, %v329
  %347 = vmatprep.subr.bf16.mxu0 0
  %348 = vmatpush1.bf16.msra.mxu0 %v331
  %349 = vmatprep.subr.bf16.mxu0 0
  %350 = vmatpush1.bf16.msra.mxu0 %v332
  %351 = vmatprep.subr.bf16.mxu0 0
  %352 = vmatpush1.bf16.msra.mxu0 %v333
  %353 = vmatprep.subr.bf16.mxu0 0
  %354 = vmatpush1.bf16.msra.mxu0 %v334
  %355 = vmatprep.subr.bf16.mxu0 0
  %356 = vmatpush1.bf16.msra.mxu0 %v335
  %357 = vmatprep.subr.bf16.mxu0 0
  %358 = vmatpush1.bf16.msra.mxu0 %v336
  %359 = vmatprep.subr.bf16.mxu0 0
  %360 = vmatpush1.bf16.msra.mxu0 %v337
  %361 = vmatprep.subr.bf16.mxu0 0
  %362 = vmatpush1.bf16.msra.mxu0 %v338
  %363 = vmatprep.subr.bf16.mxu0 0
  %364 = vmatpush1.bf16.msra.mxu0 0
  %365 = vmatprep.subr.bf16.mxu0 0
  %366 = vmatpush1.bf16.msra.mxu0 0
  %367 = vmatprep.subr.bf16.mxu0 0
  %368 = vmatpush1.bf16.msra.mxu0 0
  %369 = vmatprep.subr.bf16.mxu0 0
  %370 = vmatpush1.bf16.msra.mxu0 0
  %371 = vmatprep.subr.bf16.mxu0 0
  %372 = vmatpush1.bf16.msra.mxu0 0
  %373 = vmatprep.subr.bf16.mxu0 0
  %374 = vmatpush1.bf16.msra.mxu0 0
  %375 = vmatprep.subr.bf16.mxu0 0
  %376 = vmatpush1.bf16.msra.mxu0 0
  %377 = vmatprep.subr.bf16.mxu0 0
  %378 = vmatpush1.bf16.msra.mxu0 0
  %379 = vmatprep.mubr.bf16.mxu0 0
  %380 = vmatmul.mubr.bf16.gmra.mrb[0].mxu0 %v296
  %v381 = vpop.f32.mrb[0].mxu0
  %v382 = vadd.f32 0.0, %v381
  %v383 = vpop.f32.mrb[0].mxu0
  %v384 = vpop.f32.mrb[0].mxu0
  %v385 = vadd.f32 0.0, %v384
  %v386 = vpop.f32.mrb[0].mxu0
  %387 = vmatprep.mubr.bf16.mxu0 0
  %388 = vmatmul.mubr.bf16.gmra.mrb[0].mxu0 %v295
  %v389 = vpop.f32.mrb[0].mxu0
  %v390 = vadd.f32 0.0, %v389
  %v391 = vpop.f32.mrb[0].mxu0
  %v392 = vpop.f32.mrb[0].mxu0
  %v393 = vpop.f32.mrb[0].mxu0
  %394 = vdwg.mxu0
  %v395 = vadd.f32 %v261, %v382
  %v396 = vadd.f32 %v264, %v385
  %v397 = vadd.f32 %v269, %v390
  %v398 = vld [vmem:[%s2] sm:$0x1]
  %v400 = vlaneseq
  %v401 = vshrl.u32 %v400, 7
  %v402 = vsub.s32 0, %v401
  %v403 = vrot.slane %v398, %v402
  %v405 = vmul.f32 %v395, %v403
  %v406 = vmul.f32 %v396, %v403
  %v407 = vmul.f32 %v397, %v403
  %v408 = vld [vmem:[%s3] sm:$0x1]
  %v410 = vlaneseq
  %v411 = vshrl.u32 %v410, 7
  %v412 = vsub.s32 0, %v411
  %v413 = vrot.slane %v408, %v412
  %v415 = vadd.f32 %v405, %v413
  %v416 = vadd.f32 %v406, %v413
  %v417 = vadd.f32 %v407, %v413
  %v418 = vmax.f32 %v415, 0.0
  %v419 = vmax.f32 %v416, 0.0
  %v420 = vmax.f32 %v417, 0.0
  %v421 = vlaneseq
  %v422 = vshrl.u32 %v421, 7
  %v423 = vadd.s32 %v422, 8
  %v424 = vadd.s32 %v422, 16
  %v425 = vadd.s32 %v422, 1
  %v426 = vadd.s32 %v423, 1
  %v427 = vadd.s32 %v424, 1
  %vm428 = vcmp.lt.s32.totalorder %v425, 0
  %v429 = vsub.s32 0, %v425
  %v430 = vsel %vm428, %v429, %v425
  %v431 = vmul.u32.u64.compose %v430, 3817748708
  %v432 = vextract.low.u32 %v431
  %v433 = vextract.high.u32 %v431
  %v434 = vshrl.u32 %v433, 3
  %v435 = vmul.u32 %v434, 9
  %v436 = vsub.s32 %v430, %v435
  %v437 = vsub.s32 0, %v436
  %v438 = vsel %vm428, %v437, %v436
  %vm439 = vcmp.lt.s32.totalorder %v426, 0
  %v440 = vsub.s32 0, %v426
  %v441 = vsel %vm439, %v440, %v426
  %v442 = vmul.u32.u64.compose %v441, 3817748708
  %v443 = vextract.low.u32 %v442
  %v444 = vextract.high.u32 %v442
  %v445 = vshrl.u32 %v444, 3
  %v446 = vmul.u32 %v445, 9
  %v447 = vsub.s32 %v441, %v446
  %v448 = vsub.s32 0, %v447
  %v449 = vsel %vm439, %v448, %v447
  %vm450 = vcmp.lt.s32.totalorder %v427, 0
  %v451 = vsub.s32 0, %v427
  %v452 = vsel %vm450, %v451, %v427
  %v453 = vmul.u32.u64.compose %v452, 3817748708
  %v454 = vextract.low.u32 %v453
  %v455 = vextract.high.u32 %v453
  %v456 = vshrl.u32 %v455, 3
  %v457 = vmul.u32 %v456, 9
  %v458 = vsub.s32 %v452, %v457
  %v459 = vsub.s32 0, %v458
  %v460 = vsel %vm450, %v459, %v458
  %vm461 = vcmp.ne.s32.totalorder %v438, 0
  %vm462 = vcmp.ne.s32.totalorder %v449, 0
  %vm463 = vcmp.ne.s32.totalorder %v460, 0
  %vm464 = vcmp.lt.s32.totalorder %v438, 0
  %vm465 = vcmp.lt.s32.totalorder %v449, 0
  %vm466 = vcmp.lt.s32.totalorder %v460, 0
  %vm467 = vmand %vm464, %vm461
  %vm468 = vmand %vm465, %vm462
  %vm469 = vmand %vm466, %vm463
  %v470 = vadd.s32 %v438, 9
  %v471 = vadd.s32 %v449, 9
  %v472 = vadd.s32 %v460, 9
  %v473 = vsel %vm467, %v470, %v438
  %v474 = vsel %vm468, %v471, %v449
  %v475 = vsel %vm469, %v472, %v460
  %vm476 = vcmp.eq.s32.totalorder %v473, 0
  %vm477 = vcmp.eq.s32.totalorder %v474, 0
  %vm478 = vcmp.eq.s32.totalorder %v475, 0
  %v479 = vsel %vm476, 1, 0
  %v480 = vsel %vm477, 1, 0
  %v481 = vsel %vm478, 1, 0
  %vm482 = vcmp.eq.s32.totalorder %v479, 1
  %vm483 = vcmp.eq.s32.totalorder %v480, 1
  %vm484 = vcmp.eq.s32.totalorder %v481, 1
  %v485 = vsel %vm482, 0.0, %v418
  %v486 = vsel %vm483, 0.0, %v419
  %v487 = vsel %vm484, 0.0, %v420
  %488 = vst [vmem:[#allocation2] sm:$0x1] 0.0
  %489 = vst [vmem:[#allocation2 + $0x12] sm:$0x1] 0.0
  %490 = vst [vmem:[#allocation2 + $0x1] sm:$0xff] %v485
  %491 = vst [vmem:[#allocation2 + $0x9] sm:$0xff] %v486
  %492 = vst [vmem:[#allocation2 + $0x11] sm:$0x1] %v487
  %v493 = vld [vmem:[#allocation2] sm:$0xff]
  %v494 = vld [vmem:[#allocation2 + $0x8] sm:$0xff]
  %v495 = vld [vmem:[#allocation2 + $0x10] sm:$0x7]
  %v496 = vpack.c.bf16 %v494, %v493
  %v497 = vpack.c.bf16 %v495, %v495
  %v498 = vld [vmem:[%s4] sm:$0xf]
  %v499 = vld [vmem:[%s4 + $0x4] sm:$0xf]
  %v500 = vld [vmem:[%s4 + $0x8] sm:$0xf]
  %v501 = vld [vmem:[%s4 + $0xc] sm:$0xf]
  %v502 = vld [vmem:[%s4 + $0x10] sm:$0xf]
  %v503 = vld [vmem:[%s4 + $0x14] sm:$0xf]
  %v504 = vld [vmem:[%s4 + $0x18] sm:$0xf]
  %v505 = vld [vmem:[%s4 + $0x1c] sm:$0xf]
  %v506 = vld [vmem:[%s4 + $0x20] sm:$0xf]
  %v507 = vld [vmem:[%s4 + $0x24] sm:$0xf]
  %v508 = vld [vmem:[%s4 + $0x28] sm:$0xf]
  %v509 = vld [vmem:[%s4 + $0x2c] sm:$0xf]
  %v510 = vld [vmem:[%s4 + $0x30] sm:$0xf]
  %v511 = vld [vmem:[%s4 + $0x34] sm:$0xf]
  %v512 = vld [vmem:[%s4 + $0x38] sm:$0xf]
  %v513 = vld [vmem:[%s4 + $0x3c] sm:$0xf]
  %s514 = scalar_lea.vmem %s4, 64
  %v515 = vld [vmem:[%s514] sm:$0xf]
  %v516 = vld [vmem:[%s514 + $0x4] sm:$0xf]
  %v517 = vld [vmem:[%s514 + $0x8] sm:$0xf]
  %v518 = vld [vmem:[%s514 + $0xc] sm:$0xf]
  %v519 = vld [vmem:[%s514 + $0x10] sm:$0xf]
  %v520 = vld [vmem:[%s514 + $0x14] sm:$0xf]
  %v521 = vld [vmem:[%s514 + $0x18] sm:$0xf]
  %v522 = vld [vmem:[%s514 + $0x1c] sm:$0xf]
  %v523 = vld [vmem:[%s514 + $0x20] sm:$0xf]
  %v524 = vld [vmem:[%s514 + $0x24] sm:$0xf]
  %v525 = vld [vmem:[%s514 + $0x28] sm:$0xf]
  %v526 = vld [vmem:[%s514 + $0x2c] sm:$0xf]
  %v527 = vld [vmem:[%s514 + $0x30] sm:$0xf]
  %v528 = vld [vmem:[%s514 + $0x34] sm:$0xf]
  %v529 = vld [vmem:[%s514 + $0x38] sm:$0xf]
  %v530 = vld [vmem:[%s514 + $0x3c] sm:$0xf]
  %v532 = vshrl.u32 %v496, 16
  %v534 = vshll.u32 %v496, 16
  %v536 = vrot.slane %v534, 1
  %v537 = vor.u32 %v532, %v536
  %v539 = vshll.u32 %v497, 16
  %v541 = vrot.slane %v539, 1
  %v542 = vsel %vm65, %v537, %v541
  %v543 = vshrl.u32 %v497, 16
  %v563 = vunpack.c.l.b16 %v515
  %v564 = vunpack.c.l.b16 %v516
  %v565 = vunpack.c.l.b16 %v517
  %v566 = vunpack.c.l.b16 %v518
  %v567 = vunpack.c.l.b16 %v519
  %v568 = vunpack.c.l.b16 %v520
  %v569 = vunpack.c.l.b16 %v521
  %v570 = vunpack.c.l.b16 %v522
  %v571 = vunpack.c.l.b16 %v523
  %v572 = vunpack.c.l.b16 %v524
  %v573 = vunpack.c.l.b16 %v525
  %v574 = vunpack.c.l.b16 %v526
  %v575 = vunpack.c.l.b16 %v527
  %v576 = vunpack.c.l.b16 %v528
  %v577 = vunpack.c.l.b16 %v529
  %v578 = vunpack.c.l.b16 %v530
  %v579 = vpack.c.b16 %v564, %v563
  %v580 = vpack.c.b16 %v566, %v565
  %v581 = vpack.c.b16 %v568, %v567
  %v582 = vpack.c.b16 %v570, %v569
  %v583 = vpack.c.b16 %v572, %v571
  %v584 = vpack.c.b16 %v574, %v573
  %v585 = vpack.c.b16 %v576, %v575
  %v586 = vpack.c.b16 %v578, %v577
  %595 = vmatprep.subr.bf16.mxu0 0
  %596 = vmatpush1.bf16.msra.mxu0 %v579
  %597 = vmatprep.subr.bf16.mxu0 0
  %598 = vmatpush1.bf16.msra.mxu0 %v580
  %599 = vmatprep.subr.bf16.mxu0 0
  %600 = vmatpush1.bf16.msra.mxu0 %v581
  %601 = vmatprep.subr.bf16.mxu0 0
  %602 = vmatpush1.bf16.msra.mxu0 %v582
  %603 = vmatprep.subr.bf16.mxu0 0
  %604 = vmatpush1.bf16.msra.mxu0 %v583
  %605 = vmatprep.subr.bf16.mxu0 0
  %606 = vmatpush1.bf16.msra.mxu0 %v584
  %607 = vmatprep.subr.bf16.mxu0 0
  %608 = vmatpush1.bf16.msra.mxu0 %v585
  %609 = vmatprep.subr.bf16.mxu0 0
  %610 = vmatpush1.bf16.msra.mxu0 %v586
  %611 = vmatprep.subr.bf16.mxu0 0
  %612 = vmatpush1.bf16.msra.mxu0 0
  %613 = vmatprep.subr.bf16.mxu0 0
  %614 = vmatpush1.bf16.msra.mxu0 0
  %615 = vmatprep.subr.bf16.mxu0 0
  %616 = vmatpush1.bf16.msra.mxu0 0
  %617 = vmatprep.subr.bf16.mxu0 0
  %618 = vmatpush1.bf16.msra.mxu0 0
  %619 = vmatprep.subr.bf16.mxu0 0
  %620 = vmatpush1.bf16.msra.mxu0 0
  %621 = vmatprep.subr.bf16.mxu0 0
  %622 = vmatpush1.bf16.msra.mxu0 0
  %623 = vmatprep.subr.bf16.mxu0 0
  %624 = vmatpush1.bf16.msra.mxu0 0
  %625 = vmatprep.subr.bf16.mxu0 0
  %626 = vmatpush1.bf16.msra.mxu0 0
  %627 = vmatprep.mubr.bf16.mxu0 0
  %628 = vmatmul.mubr.bf16.gmra.mrb[0].mxu0 %v542
  %v629 = vpop.f32.mrb[0].mxu0
  %v630 = vadd.f32 0.0, %v629
  %v631 = vpop.f32.mrb[0].mxu0
  %v632 = vpop.f32.mrb[0].mxu0
  %v633 = vadd.f32 0.0, %v632
  %v634 = vpop.f32.mrb[0].mxu0
  %635 = vmatprep.mubr.bf16.mxu0 0
  %636 = vmatmul.mubr.bf16.gmra.mrb[0].mxu0 %v543
  %v637 = vpop.f32.mrb[0].mxu0
  %v638 = vadd.f32 0.0, %v637
  %v639 = vpop.f32.mrb[0].mxu0
  %v640 = vpop.f32.mrb[0].mxu0
  %v641 = vpop.f32.mrb[0].mxu0
  %642 = vdwg.mxu0
  %v659 = vunpack.c.l.b16 %v498
  %v660 = vunpack.c.l.b16 %v499
  %v661 = vunpack.c.l.b16 %v500
  %v662 = vunpack.c.l.b16 %v501
  %v663 = vunpack.c.l.b16 %v502
  %v664 = vunpack.c.l.b16 %v503
  %v665 = vunpack.c.l.b16 %v504
  %v666 = vunpack.c.l.b16 %v505
  %v667 = vunpack.c.l.b16 %v506
  %v668 = vunpack.c.l.b16 %v507
  %v669 = vunpack.c.l.b16 %v508
  %v670 = vunpack.c.l.b16 %v509
  %v671 = vunpack.c.l.b16 %v510
  %v672 = vunpack.c.l.b16 %v511
  %v673 = vunpack.c.l.b16 %v512
  %v674 = vunpack.c.l.b16 %v513
  %v675 = vpack.c.b16 %v660, %v659
  %v676 = vpack.c.b16 %v662, %v661
  %v677 = vpack.c.b16 %v664, %v663
  %v678 = vpack.c.b16 %v666, %v665
  %v679 = vpack.c.b16 %v668, %v667
  %v680 = vpack.c.b16 %v670, %v669
  %v681 = vpack.c.b16 %v672, %v671
  %v682 = vpack.c.b16 %v674, %v673
  %691 = vmatprep.subr.bf16.mxu0 0
  %692 = vmatpush1.bf16.msra.mxu0 %v675
  %693 = vmatprep.subr.bf16.mxu0 0
  %694 = vmatpush1.bf16.msra.mxu0 %v676
  %695 = vmatprep.subr.bf16.mxu0 0
  %696 = vmatpush1.bf16.msra.mxu0 %v677
  %697 = vmatprep.subr.bf16.mxu0 0
  %698 = vmatpush1.bf16.msra.mxu0 %v678
  %699 = vmatprep.subr.bf16.mxu0 0
  %700 = vmatpush1.bf16.msra.mxu0 %v679
  %701 = vmatprep.subr.bf16.mxu0 0
  %702 = vmatpush1.bf16.msra.mxu0 %v680
  %703 = vmatprep.subr.bf16.mxu0 0
  %704 = vmatpush1.bf16.msra.mxu0 %v681
  %705 = vmatprep.subr.bf16.mxu0 0
  %706 = vmatpush1.bf16.msra.mxu0 %v682
  %707 = vmatprep.subr.bf16.mxu0 0
  %708 = vmatpush1.bf16.msra.mxu0 0
  %709 = vmatprep.subr.bf16.mxu0 0
  %710 = vmatpush1.bf16.msra.mxu0 0
  %711 = vmatprep.subr.bf16.mxu0 0
  %712 = vmatpush1.bf16.msra.mxu0 0
  %713 = vmatprep.subr.bf16.mxu0 0
  %714 = vmatpush1.bf16.msra.mxu0 0
  %715 = vmatprep.subr.bf16.mxu0 0
  %716 = vmatpush1.bf16.msra.mxu0 0
  %717 = vmatprep.subr.bf16.mxu0 0
  %718 = vmatpush1.bf16.msra.mxu0 0
  %719 = vmatprep.subr.bf16.mxu0 0
  %720 = vmatpush1.bf16.msra.mxu0 0
  %721 = vmatprep.subr.bf16.mxu0 0
  %722 = vmatpush1.bf16.msra.mxu0 0
  %723 = vmatprep.mubr.bf16.mxu0 0
  %724 = vmatmul.mubr.bf16.gmra.mrb[0].mxu0 %v496
  %v725 = vpop.f32.mrb[0].mxu0
  %v726 = vadd.f32 %v630, %v725
  %v727 = vpop.f32.mrb[0].mxu0
  %v728 = vpop.f32.mrb[0].mxu0
  %v729 = vadd.f32 %v633, %v728
  %v730 = vpop.f32.mrb[0].mxu0
  %731 = vmatprep.mubr.bf16.mxu0 0
  %732 = vmatmul.mubr.bf16.gmra.mrb[0].mxu0 %v497
  %v733 = vpop.f32.mrb[0].mxu0
  %v734 = vadd.f32 %v638, %v733
  %v735 = vpop.f32.mrb[0].mxu0
  %v736 = vpop.f32.mrb[0].mxu0
  %v737 = vpop.f32.mrb[0].mxu0
  %738 = vdwg.mxu0
  %s739 = scalar_lea.vmem %s4, 128
  %v740 = vld [vmem:[%s739] sm:$0xf]
  %v741 = vld [vmem:[%s739 + $0x4] sm:$0xf]
  %v742 = vld [vmem:[%s739 + $0x8] sm:$0xf]
  %v743 = vld [vmem:[%s739 + $0xc] sm:$0xf]
  %v744 = vld [vmem:[%s739 + $0x10] sm:$0xf]
  %v745 = vld [vmem:[%s739 + $0x14] sm:$0xf]
  %v746 = vld [vmem:[%s739 + $0x18] sm:$0xf]
  %v747 = vld [vmem:[%s739 + $0x1c] sm:$0xf]
  %v748 = vld [vmem:[%s739 + $0x20] sm:$0xf]
  %v749 = vld [vmem:[%s739 + $0x24] sm:$0xf]
  %v750 = vld [vmem:[%s739 + $0x28] sm:$0xf]
  %v751 = vld [vmem:[%s739 + $0x2c] sm:$0xf]
  %v752 = vld [vmem:[%s739 + $0x30] sm:$0xf]
  %v753 = vld [vmem:[%s739 + $0x34] sm:$0xf]
  %v754 = vld [vmem:[%s739 + $0x38] sm:$0xf]
  %v755 = vld [vmem:[%s739 + $0x3c] sm:$0xf]
  %v758 = vrot.slane %v496, 1
  %v759 = vrot.slane %v497, 1
  %v760 = vsel %vm293, %v758, %v759
  %v779 = vunpack.c.l.b16 %v740
  %v780 = vunpack.c.l.b16 %v741
  %v781 = vunpack.c.l.b16 %v742
  %v782 = vunpack.c.l.b16 %v743
  %v783 = vunpack.c.l.b16 %v744
  %v784 = vunpack.c.l.b16 %v745
  %v785 = vunpack.c.l.b16 %v746
  %v786 = vunpack.c.l.b16 %v747
  %v787 = vunpack.c.l.b16 %v748
  %v788 = vunpack.c.l.b16 %v749
  %v789 = vunpack.c.l.b16 %v750
  %v790 = vunpack.c.l.b16 %v751
  %v791 = vunpack.c.l.b16 %v752
  %v792 = vunpack.c.l.b16 %v753
  %v793 = vunpack.c.l.b16 %v754
  %v794 = vunpack.c.l.b16 %v755
  %v795 = vpack.c.b16 %v780, %v779
  %v796 = vpack.c.b16 %v782, %v781
  %v797 = vpack.c.b16 %v784, %v783
  %v798 = vpack.c.b16 %v786, %v785
  %v799 = vpack.c.b16 %v788, %v787
  %v800 = vpack.c.b16 %v790, %v789
  %v801 = vpack.c.b16 %v792, %v791
  %v802 = vpack.c.b16 %v794, %v793
  %811 = vmatprep.subr.bf16.mxu0 0
  %812 = vmatpush1.bf16.msra.mxu0 %v795
  %813 = vmatprep.subr.bf16.mxu0 0
  %814 = vmatpush1.bf16.msra.mxu0 %v796
  %815 = vmatprep.subr.bf16.mxu0 0
  %816 = vmatpush1.bf16.msra.mxu0 %v797
  %817 = vmatprep.subr.bf16.mxu0 0
  %818 = vmatpush1.bf16.msra.mxu0 %v798
  %819 = vmatprep.subr.bf16.mxu0 0
  %820 = vmatpush1.bf16.msra.mxu0 %v799
  %821 = vmatprep.subr.bf16.mxu0 0
  %822 = vmatpush1.bf16.msra.mxu0 %v800
  %823 = vmatprep.subr.bf16.mxu0 0
  %824 = vmatpush1.bf16.msra.mxu0 %v801
  %825 = vmatprep.subr.bf16.mxu0 0
  %826 = vmatpush1.bf16.msra.mxu0 %v802
  %827 = vmatprep.subr.bf16.mxu0 0
  %828 = vmatpush1.bf16.msra.mxu0 0
  %829 = vmatprep.subr.bf16.mxu0 0
  %830 = vmatpush1.bf16.msra.mxu0 0
  %831 = vmatprep.subr.bf16.mxu0 0
  %832 = vmatpush1.bf16.msra.mxu0 0
  %833 = vmatprep.subr.bf16.mxu0 0
  %834 = vmatpush1.bf16.msra.mxu0 0
  %835 = vmatprep.subr.bf16.mxu0 0
  %836 = vmatpush1.bf16.msra.mxu0 0
  %837 = vmatprep.subr.bf16.mxu0 0
  %838 = vmatpush1.bf16.msra.mxu0 0
  %839 = vmatprep.subr.bf16.mxu0 0
  %840 = vmatpush1.bf16.msra.mxu0 0
  %841 = vmatprep.subr.bf16.mxu0 0
  %842 = vmatpush1.bf16.msra.mxu0 0
  %843 = vmatprep.mubr.bf16.mxu0 0
  %844 = vmatmul.mubr.bf16.gmra.mrb[0].mxu0 %v760
  %v845 = vpop.f32.mrb[0].mxu0
  %v846 = vadd.f32 0.0, %v845
  %v847 = vpop.f32.mrb[0].mxu0
  %v848 = vpop.f32.mrb[0].mxu0
  %v849 = vadd.f32 0.0, %v848
  %v850 = vpop.f32.mrb[0].mxu0
  %851 = vmatprep.mubr.bf16.mxu0 0
  %852 = vmatmul.mubr.bf16.gmra.mrb[0].mxu0 %v759
  %v853 = vpop.f32.mrb[0].mxu0
  %v854 = vadd.f32 0.0, %v853
  %v855 = vpop.f32.mrb[0].mxu0
  %v856 = vpop.f32.mrb[0].mxu0
  %v857 = vpop.f32.mrb[0].mxu0
  %858 = vdwg.mxu0
  %v859 = vadd.f32 %v726, %v846
  %v860 = vadd.f32 %v729, %v849
  %v861 = vadd.f32 %v734, %v854
  %v862 = vld [vmem:[%s5] sm:$0x1]
  %v864 = vlaneseq
  %v865 = vshrl.u32 %v864, 7
  %v866 = vsub.s32 0, %v865
  %v867 = vrot.slane %v862, %v866
  %v869 = vmul.f32 %v859, %v867
  %v870 = vld [vmem:[%s6] sm:$0x1]
  %v872 = vlaneseq
  %v873 = vshrl.u32 %v872, 7
  %v874 = vsub.s32 0, %v873
  %v875 = vrot.slane %v870, %v874
  %v877 = vadd.f32 %v869, %v875
  %v878 = vld [vmem:[%s0 + $0x1] sm:$0xff]
  %v879 = vadd.f32 %v877, %v878
  %v880 = vmax.f32 %v879, 0.0
  %881 = vst [vmem:[%s7] sm:$0xff] %v880
  %v882 = vld [vmem:[%s5] sm:$0x1]
  %v884 = vlaneseq
  %v885 = vshrl.u32 %v884, 7
  %v886 = vsub.s32 0, %v885
  %v887 = vrot.slane %v882, %v886
  %v889 = vmul.f32 %v860, %v887
  %v890 = vmul.f32 %v861, %v887
  %v891 = vld [vmem:[%s6] sm:$0x1]
  %v893 = vlaneseq
  %v894 = vshrl.u32 %v893, 7
  %v895 = vsub.s32 0, %v894
  %v896 = vrot.slane %v891, %v895
  %v898 = vadd.f32 %v889, %v896
  %v899 = vadd.f32 %v890, %v896
  %v900 = vld [vmem:[%s0 + $0xa] sm:$0xff]
  %v902 = vrot.slane %v900, 7
  %v904 = vadd.f32 %v898, %v902
  %v905 = vadd.f32 %v899, %v902
  %v906 = vmax.f32 %v904, 0.0
  %v907 = vmax.f32 %v905, 0.0
  %908 = vst [vmem:[%s7 + $0x7] sm:$0xfe] %v906
  %909 = vst [vmem:[%s7 + $0xf] sm:$0x1] %v907
  // Predicated region
  $region30: #{basic_block_forward.1} parent=0 // pred_check
    _
  $region31: #{basic_block_forward.1} parent=0 // pred_check_branch
    %911 = sbr.rel (0) target = $region33
  $region32: #{basic_block_forward.1} parent=0 // pred_region
    _
  $region33: #{basic_block_forward.1} parent=0 // pred_fallthru
    _
  // Predicated region
  $region34: #{basic_block_forward.1} parent=0 // pred_check
    _
  $region35: #{basic_block_forward.1} parent=0 // pred_check_branch
    %913 = sbr.rel (0) target = $region37
  $region36: #{basic_block_forward.1} parent=0 // pred_region
    _
  $region37: #{basic_block_forward.1} parent=0 // pred_fallthru
    _

</llo_original>
